<compile_context>
chip_gen: v7x
topology: tpu7x:2x2x1
jax: 0.10.0
libtpu: 0.0.40
codegen_flags: <defaults>
</compile_context>

<pallas_src>
import jax
import jax.numpy as jnp
from jax.experimental import pallas as pl
from jax.experimental.pallas import tpu as pltpu

IGNORE_INDEX = -100                      # PyTorch CrossEntropyLoss default
_PER_BUFFER_VMEM_BUDGET = 6 * 1024 * 1024  # bytes per pipeline stage (x2 double-buffered)


def _round_up(x, m):
    return -(-x // m) * m


def _detect_num_tensorcores():
    """2 only on chips exposing two independently addressable TensorCores
    (v7x); single-TC inference chips (v5e/v6e) and megacore chips return 1."""
    try:
        dev = jax.devices()[0]
        if dev.platform != "tpu":
            return 1
        kind = str(getattr(dev, "device_kind", "")).lower()
        if "v7" in kind or "7x" in kind:
            return 2
    except Exception:
        pass
    return 1


def _ce_partial(logits, targets):
    """Per-tile CE partial sums.

    logits:  (C, TN) float  -- classes on sublanes, tokens on lanes (dense).
    targets: (1, TN) int32.
    Returns ((1,1) sum of NLL over valid tokens, (1,1) valid-token count).
    """
    x = logits if logits.dtype == jnp.float32 else logits.astype(jnp.float32)
    m = jnp.max(x, axis=0, keepdims=True)                               # (1,TN)
    lse = jnp.log(jnp.sum(jnp.exp(x - m), axis=0, keepdims=True)) + m   # (1,TN)
    cls_ids = jax.lax.broadcasted_iota(jnp.int32, (x.shape[0], 1), 0)   # (C,1)
    picked = jnp.sum(jnp.where(cls_ids == targets, x, 0.0),
                     axis=0, keepdims=True)                             # (1,TN)
    valid = targets != IGNORE_INDEX                                     # (1,TN)
    nll = jnp.where(valid, lse - picked, 0.0)                           # (1,TN)
    return (jnp.sum(nll, axis=1, keepdims=True),
            jnp.sum(valid.astype(jnp.float32), axis=1, keepdims=True))


def _tagger_loss_kernel(tag_l_ref, tag_g_ref, comb_l_ref, comb_g_ref,
                        ts_out, tc_out, cs_out, cc_out):
    t = pl.program_id(1)  # token-tile (reduction) axis, last, "arbitrary"

    @pl.when(t == 0)
    def _init():
        ts_out[...] = jnp.zeros_like(ts_out)
        tc_out[...] = jnp.zeros_like(tc_out)
        cs_out[...] = jnp.zeros_like(cs_out)
        cc_out[...] = jnp.zeros_like(cc_out)

    ts, tc = _ce_partial(tag_l_ref[...], tag_g_ref[...])
    cs, cc = _ce_partial(comb_l_ref[...], comb_g_ref[...])
    # Output blocks are resident across the t axis -> accumulate in place.
    ts_out[...] += ts
    tc_out[...] += tc
    cs_out[...] += cs
    cc_out[...] += cc


def tagger_loss(tagger_logits, comb_logits, tagger_gts, comb_gts,
                *, tile_tokens=None, num_cores=None):
    """tagger_logits [B,T,C_tag], comb_logits [B,T,C_comb], *_gts [B,T] int
    -> scalar f32 loss (sum of the two mean CEs)."""
    B, T, C_tag = tagger_logits.shape
    _, _, C_comb = comb_logits.shape
    N = B * T

    tag_l = tagger_logits.reshape(N, C_tag)
    comb_l = comb_logits.reshape(N, C_comb)
    tag_g = tagger_gts.reshape(N).astype(jnp.int32)
    comb_g = comb_gts.reshape(N).astype(jnp.int32)

    if num_cores is None:
        num_cores = _detect_num_tensorcores()

    # --- token-tile sizing from a VMEM budget (classes are dense on sublanes,
    # targets cost 8 padded sublanes of i32 per lane in VMEM) -----------------
    itemsize = tagger_logits.dtype.itemsize
    if tile_tokens is None:
        per_tok_vmem = (C_tag + C_comb) * itemsize + 2 * 8 * 4
        tile_tokens = max(1024,
                          (_PER_BUFFER_VMEM_BUDGET // per_tok_vmem) // 128 * 128)
    tn = min(_round_up(tile_tokens, 128), _round_up(N, 128))

    n_tiles = _round_up(N, tn) // tn
    if n_tiles < num_cores:
        num_cores = 1
    tiles_per_core = _round_up(n_tiles, num_cores) // num_cores
    n_tiles = num_cores * tiles_per_core
    n_pad = n_tiles * tn

    pad = n_pad - N
    if pad:
        tag_l = jnp.pad(tag_l, ((0, pad), (0, 0)))
        comb_l = jnp.pad(comb_l, ((0, pad), (0, 0)))
        tag_g = jnp.pad(tag_g, (0, pad), constant_values=IGNORE_INDEX)
        comb_g = jnp.pad(comb_g, (0, pad), constant_values=IGNORE_INDEX)

    # Layout plumbing: classes -> sublanes, tokens -> lanes (lane-dense DMAs).
    tag_l_t = tag_l.T                  # (C_tag,  n_pad)
    comb_l_t = comb_l.T                # (C_comb, n_pad)
    tag_g = tag_g.reshape(1, n_pad)    # (1, n_pad)
    comb_g = comb_g.reshape(1, n_pad)  # (1, n_pad)

    logits_bytes = (tag_l_t.size * tag_l_t.dtype.itemsize
                    + comb_l_t.size * comb_l_t.dtype.itemsize)
    cost = pl.CostEstimate(
        flops=7 * n_pad * (C_tag + C_comb),
        transcendentals=n_pad * (C_tag + C_comb + 2),
        bytes_accessed=logits_bytes + 2 * n_pad * 4 + 4 * num_cores * 4,
    )

    def _call(nc, tpc):
        def tok_map(p, t):
            return (0, p * tpc + t)

        def out_map(p, t):
            return (p, 0)

        lead_sem = pltpu.CORE_PARALLEL if nc > 1 else pltpu.ARBITRARY
        partial_shape = jax.ShapeDtypeStruct((nc, 1), jnp.float32)
        out_block = pl.BlockSpec((1, 1), out_map)

        return pl.pallas_call(
            _tagger_loss_kernel,
            out_shape=(partial_shape,) * 4,
            grid_spec=pltpu.PrefetchScalarGridSpec(
                num_scalar_prefetch=0,
                grid=(nc, tpc),
                in_specs=[
                    pl.BlockSpec((C_tag, tn), tok_map),
                    pl.BlockSpec((1, tn), tok_map),
                    pl.BlockSpec((C_comb, tn), tok_map),
                    pl.BlockSpec((1, tn), tok_map),
                ],
                out_specs=(out_block,) * 4,
            ),
            compiler_params=pltpu.CompilerParams(
                dimension_semantics=(lead_sem, pltpu.ARBITRARY),
                vmem_limit_bytes=32 * 1024 * 1024,
            ),
            cost_estimate=cost,
        )(tag_l_t, tag_g, comb_l_t, comb_g)

    try:
        ts, tc, cs, cc = _call(num_cores, tiles_per_core)
    except Exception:
        if num_cores == 1:
            raise
        # Fallback: CORE_PARALLEL rejected on this chip/toolchain -> run the
        # same padded layout as a single serial grid (identical results).
        ts, tc, cs, cc = _call(1, n_tiles)

    tag_sum = jnp.sum(ts)
    tag_cnt = jnp.sum(tc)
    comb_sum = jnp.sum(cs)
    comb_cnt = jnp.sum(cc)
    # Mean reduction (size_average=True). PyTorch returns NaN when every target
    # is ignore_index; we return 0 for that degenerate case.
    return (tag_sum / jnp.maximum(tag_cnt, 1.0)
            + comb_sum / jnp.maximum(comb_cnt, 1.0))


def _reference_loss(tagger_logits, comb_logits, tagger_gts, comb_gts):
    """Plain-JAX reference (matches nn.CrossEntropyLoss defaults)."""
    def ce(logits, gts):
        logits = logits.astype(jnp.float32)
        logp = jax.nn.log_softmax(logits, axis=-1)
        valid = gts != IGNORE_INDEX
        safe_gts = jnp.where(valid, gts, 0)
        nll = -jnp.take_along_axis(logp, safe_gts[..., None], axis=-1)[..., 0]
        nll = jnp.where(valid, nll, 0.0)
        return jnp.sum(nll) / jnp.maximum(jnp.sum(valid), 1)
    return ce(tagger_logits, tagger_gts) + ce(comb_logits, comb_gts)


if __name__ == "__main__":
    key = jax.random.PRNGKey(0)
    k1, k2, k3, k4 = jax.random.split(key, 4)

    # Small shapes consistent with the module (per-token tagger/insmod heads).
    B, T = 2, 8
    C_TAG = 32    # tagger classes
    C_COMB = 32   # insert/modify classes (~ max_generate + extras)

    tagger_logits = jax.random.normal(k1, (B, T, C_TAG), dtype=jnp.float32)
    comb_logits = jax.random.normal(k2, (B, T, C_COMB), dtype=jnp.float32)
    tagger_gts = jax.random.randint(k3, (B, T), 0, C_TAG, dtype=jnp.int32)
    comb_gts = jax.random.randint(k4, (B, T), 0, C_COMB, dtype=jnp.int32)

    loss = jax.block_until_ready(
        tagger_loss(tagger_logits, comb_logits, tagger_gts, comb_gts))
    ref = _reference_loss(tagger_logits, comb_logits, tagger_gts, comb_gts)
    assert jnp.allclose(loss, ref, rtol=1e-5, atol=1e-5), (loss, ref)

    # Second check: multi-tile accumulation, token padding (N not a multiple
    # of the tile), and ignore_index handling.
    k5, k6, k7, k8, k9 = jax.random.split(jax.random.PRNGKey(1), 5)
    B2, T2 = 2, 1664  # N = 3328 -> 7 tiles of 512, padded to 3584
    tl2 = jax.random.normal(k5, (B2, T2, C_TAG), dtype=jnp.float32)
    cl2 = jax.random.normal(k6, (B2, T2, C_COMB), dtype=jnp.float32)
    tg2 = jax.random.randint(k7, (B2, T2), 0, C_TAG, dtype=jnp.int32)
    cg2 = jax.random.randint(k8, (B2, T2), 0, C_COMB, dtype=jnp.int32)
    tg2 = jnp.where(jax.random.bernoulli(k9, 0.1, (B2, T2)),
                    jnp.int32(IGNORE_INDEX), tg2)

    loss2 = jax.block_until_ready(
        tagger_loss(tl2, cl2, tg2, cg2, tile_tokens=512))
    ref2 = _reference_loss(tl2, cl2, tg2, cg2)
    assert jnp.allclose(loss2, ref2, rtol=1e-5, atol=1e-5), (loss2, ref2)

    # Third check: bf16 logits stay bf16 through the DMA (cast only in-kernel),
    # default (large) auto tile.
    tl3 = tl2.astype(jnp.bfloat16)
    cl3 = cl2.astype(jnp.bfloat16)
    loss3 = jax.block_until_ready(tagger_loss(tl3, cl3, tg2, cg2))
    ref3 = _reference_loss(tl3, cl3, tg2, cg2)
    assert jnp.allclose(loss3, ref3, rtol=1e-4, atol=1e-4), (loss3, ref3)

    print("KERNEL_OK")
</pallas_src>

<mosaic_0001>
module attributes {stable_mosaic.version = 11 : i64} {
  func.func @_tagger_loss_kernel(%arg0: i32, %arg1: i32, %arg2: memref<32x128xf32, #tpu.memory_space<vmem>>, %arg3: memref<1x128xi32, #tpu.memory_space<vmem>>, %arg4: memref<32x128xf32, #tpu.memory_space<vmem>>, %arg5: memref<1x128xi32, #tpu.memory_space<vmem>>, %arg6: memref<1x1xf32, #tpu.memory_space<vmem>>, %arg7: memref<1x1xf32, #tpu.memory_space<vmem>>, %arg8: memref<1x1xf32, #tpu.memory_space<vmem>>, %arg9: memref<1x1xf32, #tpu.memory_space<vmem>>) attributes {dimension_semantics = [#tpu.dimension_semantics<arbitrary>, #tpu.dimension_semantics<arbitrary>], iteration_bounds = array<i64: 1, 1>, scalar_prefetch = 0 : i64, scratch_operands = 0 : i64, tpu.core_type = #tpu.core_type<tc>, window_params = [{transform_indices = @transform_0, window_bounds = array<i64: 32, 128>}, {transform_indices = @transform_1, window_bounds = array<i64: 1, 128>}, {transform_indices = @transform_2, window_bounds = array<i64: 32, 128>}, {transform_indices = @transform_3, window_bounds = array<i64: 1, 128>}, {transform_indices = @transform_4, window_bounds = array<i64: 1, 1>}, {transform_indices = @transform_5, window_bounds = array<i64: 1, 1>}, {transform_indices = @transform_6, window_bounds = array<i64: 1, 1>}, {transform_indices = @transform_7, window_bounds = array<i64: 1, 1>}]} {
    %c0_i32 = arith.constant 0 : i32
    %0 = arith.cmpi eq, %arg1, %c0_i32 : i32
    %1 = arith.extui %0 : i1 to i32
    %c0_i32_0 = arith.constant 0 : i32
    %2 = arith.cmpi ne, %1, %c0_i32_0 : i32
    scf.if %2 {
      %cst_38 = arith.constant 0.000000e+00 : f32
      %75 = vector.broadcast %cst_38 : f32 to vector<1x1xf32>
      %c0_39 = arith.constant 0 : index
      %c0_40 = arith.constant 0 : index
      %76 = vector.load %arg6[%c0_39, %c0_40] : memref<1x1xf32, #tpu.memory_space<vmem>>, vector<1x1xf32>
      tpu.vector_store %arg6[%c0_39, %c0_40], %75 {strides = array<i32>} : memref<1x1xf32, #tpu.memory_space<vmem>>, vector<1x1xf32>,
      %cst_41 = arith.constant 0.000000e+00 : f32
      %77 = vector.broadcast %cst_41 : f32 to vector<1x1xf32>
      %c0_42 = arith.constant 0 : index
      %c0_43 = arith.constant 0 : index
      %78 = vector.load %arg7[%c0_42, %c0_43] : memref<1x1xf32, #tpu.memory_space<vmem>>, vector<1x1xf32>
      tpu.vector_store %arg7[%c0_42, %c0_43], %77 {strides = array<i32>} : memref<1x1xf32, #tpu.memory_space<vmem>>, vector<1x1xf32>,
      %cst_44 = arith.constant 0.000000e+00 : f32
      %79 = vector.broadcast %cst_44 : f32 to vector<1x1xf32>
      %c0_45 = arith.constant 0 : index
      %c0_46 = arith.constant 0 : index
      %80 = vector.load %arg8[%c0_45, %c0_46] : memref<1x1xf32, #tpu.memory_space<vmem>>, vector<1x1xf32>
      tpu.vector_store %arg8[%c0_45, %c0_46], %79 {strides = array<i32>} : memref<1x1xf32, #tpu.memory_space<vmem>>, vector<1x1xf32>,
      %cst_47 = arith.constant 0.000000e+00 : f32
      %81 = vector.broadcast %cst_47 : f32 to vector<1x1xf32>
      %c0_48 = arith.constant 0 : index
      %c0_49 = arith.constant 0 : index
      %82 = vector.load %arg9[%c0_48, %c0_49] : memref<1x1xf32, #tpu.memory_space<vmem>>, vector<1x1xf32>
      tpu.vector_store %arg9[%c0_48, %c0_49], %81 {strides = array<i32>} : memref<1x1xf32, #tpu.memory_space<vmem>>, vector<1x1xf32>,
    } else {
    }
    %c0 = arith.constant 0 : index
    %c0_1 = arith.constant 0 : index
    %3 = vector.load %arg2[%c0, %c0_1] : memref<32x128xf32, #tpu.memory_space<vmem>>, vector<32x128xf32>
    %c0_2 = arith.constant 0 : index
    %c0_3 = arith.constant 0 : index
    %4 = vector.load %arg3[%c0_2, %c0_3] : memref<1x128xi32, #tpu.memory_space<vmem>>, vector<1x128xi32>
    %cst = arith.constant dense<0xFF800000> : vector<128xf32>
    %5 = vector.multi_reduction <maximumf>, %3, %cst [0] : vector<32x128xf32> to vector<128xf32>
    %6 = vector.shape_cast %5 : vector<128xf32> to vector<1x128xf32>
    %7 = vector.broadcast %6 : vector<1x128xf32> to vector<32x128xf32>
    %8 = arith.subf %3, %7 : vector<32x128xf32>
    %9 = math.exp %8 : vector<32x128xf32>
    %cst_4 = arith.constant dense<0.000000e+00> : vector<128xf32>
    %10 = vector.multi_reduction <add>, %9, %cst_4 [0] : vector<32x128xf32> to vector<128xf32>
    %11 = vector.shape_cast %10 : vector<128xf32> to vector<1x128xf32>
    %12 = math.log %11 : vector<1x128xf32>
    %13 = arith.addf %12, %6 : vector<1x128xf32>
    %14 = tpu.iota {dimensions = array<i32: 0>} : vector<32x1xi32>
    %15 = vector.broadcast %14 : vector<32x1xi32> to vector<32x128xi32>
    %16 = vector.broadcast %4 : vector<1x128xi32> to vector<32x128xi32>
    %17 = arith.cmpi eq, %15, %16 : vector<32x128xi32>
    %cst_5 = arith.constant 0.000000e+00 : f32
    %18 = vector.broadcast %cst_5 : f32 to vector<32x128xf32>
    %19 = arith.select %17, %3, %18 : vector<32x128xi1>, vector<32x128xf32>
    %cst_6 = arith.constant dense<0.000000e+00> : vector<128xf32>
    %20 = vector.multi_reduction <add>, %19, %cst_6 [0] : vector<32x128xf32> to vector<128xf32>
    %21 = vector.shape_cast %20 : vector<128xf32> to vector<1x128xf32>
    %c-100_i32 = arith.constant -100 : i32
    %22 = vector.broadcast %c-100_i32 : i32 to vector<1x128xi32>
    %23 = arith.cmpi ne, %4, %22 : vector<1x128xi32>
    %24 = arith.subf %13, %21 : vector<1x128xf32>
    %cst_7 = arith.constant 0.000000e+00 : f32
    %25 = vector.broadcast %cst_7 : f32 to vector<1x128xf32>
    %26 = arith.select %23, %24, %25 : vector<1x128xi1>, vector<1x128xf32>
    %cst_8 = arith.constant dense<0.000000e+00> : vector<1xf32>
    %27 = vector.multi_reduction <add>, %26, %cst_8 [1] : vector<1x128xf32> to vector<1xf32>
    %28 = vector.shape_cast %27 : vector<1xf32> to vector<1x1xf32>
    %29 = arith.extui %23 : vector<1x128xi1> to vector<1x128xi32>
    %30 = arith.sitofp %29 : vector<1x128xi32> to vector<1x128xf32>
    %cst_9 = arith.constant dense<0.000000e+00> : vector<1xf32>
    %31 = vector.multi_reduction <add>, %30, %cst_9 [1] : vector<1x128xf32> to vector<1xf32>
    %32 = vector.shape_cast %31 : vector<1xf32> to vector<1x1xf32>
    %c0_10 = arith.constant 0 : index
    %c0_11 = arith.constant 0 : index
    %33 = vector.load %arg4[%c0_10, %c0_11] : memref<32x128xf32, #tpu.memory_space<vmem>>, vector<32x128xf32>
    %c0_12 = arith.constant 0 : index
    %c0_13 = arith.constant 0 : index
    %34 = vector.load %arg5[%c0_12, %c0_13] : memref<1x128xi32, #tpu.memory_space<vmem>>, vector<1x128xi32>
    %cst_14 = arith.constant dense<0xFF800000> : vector<128xf32>
    %35 = vector.multi_reduction <maximumf>, %33, %cst_14 [0] : vector<32x128xf32> to vector<128xf32>
    %36 = vector.shape_cast %35 : vector<128xf32> to vector<1x128xf32>
    %37 = vector.broadcast %36 : vector<1x128xf32> to vector<32x128xf32>
    %38 = arith.subf %33, %37 : vector<32x128xf32>
    %39 = math.exp %38 : vector<32x128xf32>
    %cst_15 = arith.constant dense<0.000000e+00> : vector<128xf32>
    %40 = vector.multi_reduction <add>, %39, %cst_15 [0] : vector<32x128xf32> to vector<128xf32>
    %41 = vector.shape_cast %40 : vector<128xf32> to vector<1x128xf32>
    %42 = math.log %41 : vector<1x128xf32>
    %43 = arith.addf %42, %36 : vector<1x128xf32>
    %44 = tpu.iota {dimensions = array<i32: 0>} : vector<32x1xi32>
    %45 = vector.broadcast %44 : vector<32x1xi32> to vector<32x128xi32>
    %46 = vector.broadcast %34 : vector<1x128xi32> to vector<32x128xi32>
    %47 = arith.cmpi eq, %45, %46 : vector<32x128xi32>
    %cst_16 = arith.constant 0.000000e+00 : f32
    %48 = vector.broadcast %cst_16 : f32 to vector<32x128xf32>
    %49 = arith.select %47, %33, %48 : vector<32x128xi1>, vector<32x128xf32>
    %cst_17 = arith.constant dense<0.000000e+00> : vector<128xf32>
    %50 = vector.multi_reduction <add>, %49, %cst_17 [0] : vector<32x128xf32> to vector<128xf32>
    %51 = vector.shape_cast %50 : vector<128xf32> to vector<1x128xf32>
    %c-100_i32_18 = arith.constant -100 : i32
    %52 = vector.broadcast %c-100_i32_18 : i32 to vector<1x128xi32>
    %53 = arith.cmpi ne, %34, %52 : vector<1x128xi32>
    %54 = arith.subf %43, %51 : vector<1x128xf32>
    %cst_19 = arith.constant 0.000000e+00 : f32
    %55 = vector.broadcast %cst_19 : f32 to vector<1x128xf32>
    %56 = arith.select %53, %54, %55 : vector<1x128xi1>, vector<1x128xf32>
    %cst_20 = arith.constant dense<0.000000e+00> : vector<1xf32>
    %57 = vector.multi_reduction <add>, %56, %cst_20 [1] : vector<1x128xf32> to vector<1xf32>
    %58 = vector.shape_cast %57 : vector<1xf32> to vector<1x1xf32>
    %59 = arith.extui %53 : vector<1x128xi1> to vector<1x128xi32>
    %60 = arith.sitofp %59 : vector<1x128xi32> to vector<1x128xf32>
    %cst_21 = arith.constant dense<0.000000e+00> : vector<1xf32>
    %61 = vector.multi_reduction <add>, %60, %cst_21 [1] : vector<1x128xf32> to vector<1xf32>
    %62 = vector.shape_cast %61 : vector<1xf32> to vector<1x1xf32>
    %c0_22 = arith.constant 0 : index
    %c0_23 = arith.constant 0 : index
    %63 = vector.load %arg6[%c0_22, %c0_23] : memref<1x1xf32, #tpu.memory_space<vmem>>, vector<1x1xf32>
    %64 = arith.addf %63, %28 : vector<1x1xf32>
    %c0_24 = arith.constant 0 : index
    %c0_25 = arith.constant 0 : index
    %65 = vector.load %arg6[%c0_24, %c0_25] : memref<1x1xf32, #tpu.memory_space<vmem>>, vector<1x1xf32>
    tpu.vector_store %arg6[%c0_24, %c0_25], %64 {strides = array<i32>} : memref<1x1xf32, #tpu.memory_space<vmem>>, vector<1x1xf32>,
    %c0_26 = arith.constant 0 : index
    %c0_27 = arith.constant 0 : index
    %66 = vector.load %arg7[%c0_26, %c0_27] : memref<1x1xf32, #tpu.memory_space<vmem>>, vector<1x1xf32>
    %67 = arith.addf %66, %32 : vector<1x1xf32>
    %c0_28 = arith.constant 0 : index
    %c0_29 = arith.constant 0 : index
    %68 = vector.load %arg7[%c0_28, %c0_29] : memref<1x1xf32, #tpu.memory_space<vmem>>, vector<1x1xf32>
    tpu.vector_store %arg7[%c0_28, %c0_29], %67 {strides = array<i32>} : memref<1x1xf32, #tpu.memory_space<vmem>>, vector<1x1xf32>,
    %c0_30 = arith.constant 0 : index
    %c0_31 = arith.constant 0 : index
    %69 = vector.load %arg8[%c0_30, %c0_31] : memref<1x1xf32, #tpu.memory_space<vmem>>, vector<1x1xf32>
    %70 = arith.addf %69, %58 : vector<1x1xf32>
    %c0_32 = arith.constant 0 : index
    %c0_33 = arith.constant 0 : index
    %71 = vector.load %arg8[%c0_32, %c0_33] : memref<1x1xf32, #tpu.memory_space<vmem>>, vector<1x1xf32>
    tpu.vector_store %arg8[%c0_32, %c0_33], %70 {strides = array<i32>} : memref<1x1xf32, #tpu.memory_space<vmem>>, vector<1x1xf32>,
    %c0_34 = arith.constant 0 : index
    %c0_35 = arith.constant 0 : index
    %72 = vector.load %arg9[%c0_34, %c0_35] : memref<1x1xf32, #tpu.memory_space<vmem>>, vector<1x1xf32>
    %73 = arith.addf %72, %62 : vector<1x1xf32>
    %c0_36 = arith.constant 0 : index
    %c0_37 = arith.constant 0 : index
    %74 = vector.load %arg9[%c0_36, %c0_37] : memref<1x1xf32, #tpu.memory_space<vmem>>, vector<1x1xf32>
    tpu.vector_store %arg9[%c0_36, %c0_37], %73 {strides = array<i32>} : memref<1x1xf32, #tpu.memory_space<vmem>>, vector<1x1xf32>,
    return
  }
  func.func @transform_0(%arg0: i32, %arg1: i32) -> (i32, i32) {
    %c1_i32 = arith.constant 1 : i32
    %0 = arith.muli %arg0, %c1_i32 : i32
    %1 = arith.addi %0, %arg1 : i32
    %c0_i32 = arith.constant 0 : i32
    %c0_i32_0 = arith.constant 0 : i32
    return %c0_i32, %1 : i32, i32
  }
  func.func @transform_1(%arg0: i32, %arg1: i32) -> (i32, i32) {
    %c1_i32 = arith.constant 1 : i32
    %0 = arith.muli %arg0, %c1_i32 : i32
    %1 = arith.addi %0, %arg1 : i32
    %c0_i32 = arith.constant 0 : i32
    %c0_i32_0 = arith.constant 0 : i32
    return %c0_i32, %1 : i32, i32
  }
  func.func @transform_2(%arg0: i32, %arg1: i32) -> (i32, i32) {
    %c1_i32 = arith.constant 1 : i32
    %0 = arith.muli %arg0, %c1_i32 : i32
    %1 = arith.addi %0, %arg1 : i32
    %c0_i32 = arith.constant 0 : i32
    %c0_i32_0 = arith.constant 0 : i32
    return %c0_i32, %1 : i32, i32
  }
  func.func @transform_3(%arg0: i32, %arg1: i32) -> (i32, i32) {
    %c1_i32 = arith.constant 1 : i32
    %0 = arith.muli %arg0, %c1_i32 : i32
    %1 = arith.addi %0, %arg1 : i32
    %c0_i32 = arith.constant 0 : i32
    %c0_i32_0 = arith.constant 0 : i32
    return %c0_i32, %1 : i32, i32
  }
  func.func @transform_4(%arg0: i32, %arg1: i32) -> (i32, i32) {
    %c0_i32 = arith.constant 0 : i32
    %c0_i32_0 = arith.constant 0 : i32
    return %arg0, %c0_i32 : i32, i32
  }
  func.func @transform_5(%arg0: i32, %arg1: i32) -> (i32, i32) {
    %c0_i32 = arith.constant 0 : i32
    %c0_i32_0 = arith.constant 0 : i32
    return %arg0, %c0_i32 : i32, i32
  }
  func.func @transform_6(%arg0: i32, %arg1: i32) -> (i32, i32) {
    %c0_i32 = arith.constant 0 : i32
    %c0_i32_0 = arith.constant 0 : i32
    return %arg0, %c0_i32 : i32, i32
  }
  func.func @transform_7(%arg0: i32, %arg1: i32) -> (i32, i32) {
    %c0_i32 = arith.constant 0 : i32
    %c0_i32_0 = arith.constant 0 : i32
    return %arg0, %c0_i32 : i32, i32
  }
}

</mosaic_0001>

<llo_original>
// kernel: tpu_custom_call.1
$region0: #{tpu_custom_call.1}
  #allocation0 [shape = 'u32[]', space=smem, size = 0x4, offset = 0x4, fixed_abs, tag = 'smem constant byte address 0x4 - core index']
  #allocation1 [shape = 'u32[144,128]{1,0:T(1,128)}', space=vmem, size = 0x12000, scoped, tag = 'internal scratch']
  %s0 = inlined_call_operand.hbm [shape: f32[32,128], index: 0, kind: input, shape index: {}]
  %s1 = inlined_call_operand.vmem [shape: s32[1,128], index: 1, kind: input, shape index: {}]
  %s2 = inlined_call_operand.hbm [shape: f32[32,128], index: 2, kind: input, shape index: {}]
  %s3 = inlined_call_operand.vmem [shape: s32[1,128], index: 3, kind: input, shape index: {}]
  %s4 = inlined_call_operand.hbm [shape: f32[1,1], index: 4, kind: output, shape index: {0}]
  %s5 = inlined_call_operand.hbm [shape: f32[1,1], index: 5, kind: output, shape index: {1}]
  %s6 = inlined_call_operand.hbm [shape: f32[1,1], index: 6, kind: output, shape index: {2}]
  %s7 = inlined_call_operand.hbm [shape: f32[1,1], index: 7, kind: output, shape index: {3}]
  %8 = xla_tuple %s4, %s5, %s6, %s7
  %s9 = sld [smem:[#allocation0]]
  $region62: #{tpu_custom_call.1} parent=0
    _
  %s11 = ssub.s32 1, %s9
  %s12 = scalar_select 0, %s11, %s9
  $region1: #{tpu_custom_call.1} parent=0
    #allocation2 [shape = 'u8[16384]{0}', space=vmem, size = 0x4000, scoped, tag = 'input window, operand 0, single buffered']
    #allocation3 [shape = 's32[1]{0}', space=sflag, size = 0x4, scoped, tag = 'scoped memory for tpu_custom_call.1']
    #allocation4 [shape = 's32[1]{0}', space=sflag, size = 0x4, scoped, tag = 'scoped memory for tpu_custom_call.1']
    #allocation5 [shape = 'u8[16384]{0}', space=vmem, size = 0x4000, scoped, tag = 'input window, operand 2, single buffered']
    #allocation6 [shape = 's32[1]{0}', space=sflag, size = 0x4, scoped, tag = 'scoped memory for tpu_custom_call.1']
    #allocation7 [shape = 'u8[512]{0}', space=vmem, size = 0x400, scoped, tag = 'output window, operand 0, single buffered']
    #allocation8 [shape = 'u8[512]{0}', space=vmem, size = 0x400, scoped, tag = 'output window, operand 1, single buffered']
    #allocation9 [shape = 's32[1]{0}', space=sflag, size = 0x4, scoped, tag = 'scoped memory for tpu_custom_call.1']
    #allocation10 [shape = 'u8[512]{0}', space=vmem, size = 0x400, scoped, tag = 'output window, operand 2, single buffered']
    #allocation11 [shape = 'u8[512]{0}', space=vmem, size = 0x400, scoped, tag = 'output window, operand 3, single buffered']
    #allocation12 [shape = 's32[1]{0}', space=sflag, size = 0x4, scoped, tag = 'scoped memory for tpu_custom_call.1']
    %13 = vsyncpa [#allocation3], 0
    %14 = vsyncpa [#allocation6], 0
    %15 = vsyncpa [#allocation4], 0
    %16 = vsyncpa [#allocation9], 0
    %17 = vsyncpa [#allocation12], 0
    // Predicated region
    $region2: #{tpu_custom_call.1} parent=1 // pred_check
      _
    $region3: #{tpu_custom_call.1} parent=1 // pred_check_branch
      %19 = sbr.rel (0) target = $region5
    $region4: #{tpu_custom_call.1} parent=1 // pred_region
      %s20 = sadd.s32 0, 0
      %s22 = ssub.s32 512, 512
      %23 = vsyncadd [#allocation3], %s22
      %s24 = smul.addr %s20, 128
      %s25 = scalar_lea.hbm %s0, %s24
      %s26 = sshll.u32 [#allocation2], 4
      %s27 = int_to_ptr.vmem [resolvable:$true] %s26
      %32 = dma.hbm_to_vmem [thread:$0]  %s25, 512, %s27, [#allocation3], 128, 128, 8
    $region5: #{tpu_custom_call.1} parent=1 // pred_fallthru
      _
    // Predicated region
    $region6: #{tpu_custom_call.1} parent=1 // pred_check
      _
    $region7: #{tpu_custom_call.1} parent=1 // pred_check_branch
      %34 = sbr.rel (0) target = $region9
    $region8: #{tpu_custom_call.1} parent=1 // pred_region
      %s35 = sadd.s32 0, 0
      %p36 = scmp.lt.s32.totalorder %s35, 0
      %s37 = scalar_select %p36, %s35, 0
      %s38 = scalar_lea.vmem %s1, %s37
      %s39 = sadd.s32 0, 0
    $region9: #{tpu_custom_call.1} parent=1 // pred_fallthru
      _
    // Predicated region
    $region10: #{tpu_custom_call.1} parent=1 // pred_check
      _
    $region11: #{tpu_custom_call.1} parent=1 // pred_check_branch
      %41 = sbr.rel (0) target = $region13
    $region12: #{tpu_custom_call.1} parent=1 // pred_region
      %s42 = sadd.s32 0, 0
      %s44 = ssub.s32 512, 512
      %45 = vsyncadd [#allocation6], %s44
      %s46 = smul.addr %s42, 128
      %s47 = scalar_lea.hbm %s2, %s46
      %s48 = sshll.u32 [#allocation5], 4
      %s49 = int_to_ptr.vmem [resolvable:$true] %s48
      %54 = dma.hbm_to_vmem [thread:$0]  %s47, 512, %s49, [#allocation6], 128, 128, 8
    $region13: #{tpu_custom_call.1} parent=1 // pred_fallthru
      _
    // Predicated region
    $region14: #{tpu_custom_call.1} parent=1 // pred_check
      _
    $region15: #{tpu_custom_call.1} parent=1 // pred_check_branch
      %56 = sbr.rel (0) target = $region17
    $region16: #{tpu_custom_call.1} parent=1 // pred_region
      %s57 = sadd.s32 0, 0
      %p58 = scmp.lt.s32.totalorder %s57, 0
      %s59 = scalar_select %p58, %s57, 0
      %s60 = scalar_lea.vmem %s3, %s59
      %s61 = sadd.s32 0, 0
    $region17: #{tpu_custom_call.1} parent=1 // pred_fallthru
      _
    // Predicated region
    $region18: #{tpu_custom_call.1} parent=1 // pred_check
      _
    $region19: #{tpu_custom_call.1} parent=1 // pred_check_branch
      %63 = sbr.rel (0) target = $region21
    $region20: #{tpu_custom_call.1} parent=1 // pred_region
      %64 = dma.done [#allocation3], 512
    $region21: #{tpu_custom_call.1} parent=1 // pred_fallthru
      _
    // Predicated region
    $region22: #{tpu_custom_call.1} parent=1 // pred_check
      _
    $region23: #{tpu_custom_call.1} parent=1 // pred_check_branch
      %66 = sbr.rel (0) target = $region25
    $region24: #{tpu_custom_call.1} parent=1 // pred_region
      %67 = dma.done [#allocation6], 512
    $region25: #{tpu_custom_call.1} parent=1 // pred_fallthru
      _
    %s68 = sadd.s32 0, 0
    %p69 = scmp.lt.s32.totalorder %s68, 0
    %s70 = scalar_select %p69, %s68, 0
    %s71 = scalar_lea.vmem %s1, %s70
    %s72 = sadd.s32 0, 0
    %p73 = scmp.lt.s32.totalorder %s72, 0
    %s74 = scalar_select %p73, %s72, 0
    %s75 = scalar_lea.vmem %s3, %s74
    %s76 = sadd.s32 0, 0
    %s77 = sadd.s32 0, 0
    %p78 = scmp.lt.s32.totalorder %s77, 0
    %s79 = scalar_select %p78, %s77, 0
    %s80 = scalar_lea.vmem %s1, %s79
    %s81 = sadd.s32 0, 0
    %s82 = sadd.s32 0, 0
    %s83 = sadd.s32 0, 0
    %p84 = scmp.lt.s32.totalorder %s83, 0
    %s85 = scalar_select %p84, %s83, 0
    %s86 = scalar_lea.vmem %s3, %s85
    %s87 = sadd.s32 0, 0
    %p88 = scmp.eq.s32.totalorder 0, 0
    // Predicated region
    $region26: #{tpu_custom_call.1} parent=1 // pred_check
      %p89 = pneg %p88
    $region27: #{tpu_custom_call.1} parent=1 // pred_check_branch
      %91 = sbr.rel (%p89) target = $region29
    $region28: #{tpu_custom_call.1} parent=1 // pred_region
      %vm92 = vcmask 0
      %93 = vst.msk [vmem:[#allocation7] sm:$0x1] %vm92, 0.0
      %94 = vst.msk [vmem:[#allocation8] sm:$0x1] %vm92, 0.0
      %95 = vst.msk [vmem:[#allocation10] sm:$0x1] %vm92, 0.0
      %96 = vst.msk [vmem:[#allocation11] sm:$0x1] %vm92, 0.0
    $region29: #{tpu_custom_call.1} parent=1 // pred_fallthru
      _
    %v97 = vld [vmem:[#allocation2] sm:$0xff]
    %v98 = vld [vmem:[#allocation2 + $0x8] sm:$0xff]
    %v99 = vld [vmem:[#allocation2 + $0x10] sm:$0xff]
    %v100 = vld [vmem:[#allocation2 + $0x18] sm:$0xff]
    %v101 = vld [vmem:[%s80] sm:$0x1]
    %v102 = vmax.f32 %v97, %v98
    %v103 = vmax.f32 %v99, %v100
    %v104 = vmax.f32 %v102, %v103
    %v105 = vrot.slane %v104, 4
    %v106 = vmax.f32 %v104, %v105
    %v107 = vrot.slane %v106, 2
    %v108 = vmax.f32 %v106, %v107
    %v109 = vrot.slane %v108, 1
    %v110 = vmax.f32 %v108, %v109
    %v111 = vsub.f32 %v97, %v110
    %v112 = vsub.f32 %v98, %v110
    %v113 = vsub.f32 %v99, %v110
    %v114 = vsub.f32 %v100, %v110
    %v115 = vmul.f32 %v111, 1.442695
    %v116 = vpow.pop %v115
    %v117 = vmul.f32 %v112, 1.442695
    %v118 = vpow.pop %v117
    %v119 = vmul.f32 %v113, 1.442695
    %v120 = vpow.pop %v119
    %v121 = vmul.f32 %v114, 1.442695
    %v122 = vpow.pop %v121
    %v123 = vadd.f32 %v116, %v118
    %v124 = vadd.f32 %v123, %v120
    %v125 = vadd.f32 %v124, %v122
    %v126 = vrot.slane %v125, 4
    %v127 = vadd.f32 %v125, %v126
    %v128 = vrot.slane %v127, 2
    %v129 = vadd.f32 %v127, %v128
    %v130 = vrot.slane %v129, 1
    %v131 = vadd.f32 %v129, %v130
    %v132 = vlog2.pop %v131
    %v133 = vmul.f32 %v132, 0.6931472
    %v134 = vadd.f32 %v133, %v110
    %v135 = vlaneseq
    %v136 = vshrl.u32 %v135, 7
    %v137 = vadd.s32 %v136, 8
    %v138 = vadd.s32 %v136, 16
    %v139 = vadd.s32 %v136, 24
    %v140 = vlaneseq
    %v141 = vshrl.u32 %v140, 7
    %v142 = vsub.s32 0, %v141
    %v143 = vrot.slane %v101, %v142
    %vm144 = vcmp.eq.s32.totalorder %v136, %v143
    %vm145 = vcmp.eq.s32.totalorder %v137, %v143
    %vm146 = vcmp.eq.s32.totalorder %v138, %v143
    %vm147 = vcmp.eq.s32.totalorder %v139, %v143
    %v148 = vsel %vm144, %v97, 0.0
    %v149 = vsel %vm145, %v98, 0.0
    %v150 = vsel %vm146, %v99, 0.0
    %v151 = vsel %vm147, %v100, 0.0
    %v152 = vadd.f32 %v148, %v149
    %v153 = vadd.f32 %v152, %v150
    %v154 = vadd.f32 %v153, %v151
    %v155 = vrot.slane %v154, 4
    %v156 = vadd.f32 %v154, %v155
    %v157 = vrot.slane %v156, 2
    %v158 = vadd.f32 %v156, %v157
    %v159 = vrot.slane %v158, 1
    %v160 = vadd.f32 %v158, %v159
    %vm161 = vcmp.ne.s32.totalorder %v101, 4294967196
    %v162 = vsub.f32 %v134, %v160
    %v163 = vsel %vm161, %v162, 0.0
    %vm164 = vcmask 1040384
    %v165 = vsel %vm164, %v163, 0.0
    %166 = vadd.xlane.f32.xlu0 %v165
    %v167 = vpop.xlane.xlu0 %166
    %v168 = vsel %vm161, 1, 0
    %v169 = vcvt.s32.f32 %v168
    %v170 = vsel %vm164, %v169, 0.0
    %171 = vadd.xlane.f32.xlu0 %v170
    %v172 = vpop.xlane.xlu0 %171
    %v173 = vld [vmem:[#allocation5] sm:$0xff]
    %v174 = vld [vmem:[#allocation5 + $0x8] sm:$0xff]
    %v175 = vld [vmem:[#allocation5 + $0x10] sm:$0xff]
    %v176 = vld [vmem:[#allocation5 + $0x18] sm:$0xff]
    %v177 = vld [vmem:[%s86] sm:$0x1]
    %v178 = vmax.f32 %v173, %v174
    %v179 = vmax.f32 %v175, %v176
    %v180 = vmax.f32 %v178, %v179
    %v181 = vrot.slane %v180, 4
    %v182 = vmax.f32 %v180, %v181
    %v183 = vrot.slane %v182, 2
    %v184 = vmax.f32 %v182, %v183
    %v185 = vrot.slane %v184, 1
    %v186 = vmax.f32 %v184, %v185
    %v187 = vsub.f32 %v173, %v186
    %v188 = vsub.f32 %v174, %v186
    %v189 = vsub.f32 %v175, %v186
    %v190 = vsub.f32 %v176, %v186
    %v191 = vmul.f32 %v187, 1.442695
    %v192 = vpow.pop %v191
    %v193 = vmul.f32 %v188, 1.442695
    %v194 = vpow.pop %v193
    %v195 = vmul.f32 %v189, 1.442695
    %v196 = vpow.pop %v195
    %v197 = vmul.f32 %v190, 1.442695
    %v198 = vpow.pop %v197
    %v199 = vadd.f32 %v192, %v194
    %v200 = vadd.f32 %v199, %v196
    %v201 = vadd.f32 %v200, %v198
    %v202 = vrot.slane %v201, 4
    %v203 = vadd.f32 %v201, %v202
    %v204 = vrot.slane %v203, 2
    %v205 = vadd.f32 %v203, %v204
    %v206 = vrot.slane %v205, 1
    %v207 = vadd.f32 %v205, %v206
    %v208 = vlog2.pop %v207
    %v209 = vmul.f32 %v208, 0.6931472
    %v210 = vadd.f32 %v209, %v186
    %v211 = vlaneseq
    %v212 = vshrl.u32 %v211, 7
    %v213 = vsub.s32 0, %v212
    %v214 = vrot.slane %v177, %v213
    %vm215 = vcmp.eq.s32.totalorder %v136, %v214
    %vm216 = vcmp.eq.s32.totalorder %v137, %v214
    %vm217 = vcmp.eq.s32.totalorder %v138, %v214
    %vm218 = vcmp.eq.s32.totalorder %v139, %v214
    %v219 = vsel %vm215, %v173, 0.0
    %v220 = vsel %vm216, %v174, 0.0
    %v221 = vsel %vm217, %v175, 0.0
    %v222 = vsel %vm218, %v176, 0.0
    %v223 = vadd.f32 %v219, %v220
    %v224 = vadd.f32 %v223, %v221
    %v225 = vadd.f32 %v224, %v222
    %v226 = vrot.slane %v225, 4
    %v227 = vadd.f32 %v225, %v226
    %v228 = vrot.slane %v227, 2
    %v229 = vadd.f32 %v227, %v228
    %v230 = vrot.slane %v229, 1
    %v231 = vadd.f32 %v229, %v230
    %vm232 = vcmp.ne.s32.totalorder %v177, 4294967196
    %v233 = vsub.f32 %v210, %v231
    %v234 = vsel %vm232, %v233, 0.0
    %v235 = vsel %vm164, %v234, 0.0
    %236 = vadd.xlane.f32.xlu0 %v235
    %v237 = vpop.xlane.xlu0 %236
    %v238 = vsel %vm232, 1, 0
    %v239 = vcvt.s32.f32 %v238
    %v240 = vsel %vm164, %v239, 0.0
    %241 = vadd.xlane.f32.xlu0 %v240
    %v242 = vpop.xlane.xlu0 %241
    %v243 = vld [vmem:[#allocation7] sm:$0x1]
    %v244 = vadd.f32 %v243, %v167
    %vm245 = vcmask 0
    %246 = vst.msk [vmem:[#allocation7] sm:$0x1] %vm245, %v244
    %v247 = vld [vmem:[#allocation8] sm:$0x1]
    %v248 = vadd.f32 %v247, %v172
    %249 = vst.msk [vmem:[#allocation8] sm:$0x1] %vm245, %v248
    %v250 = vld [vmem:[#allocation10] sm:$0x1]
    %v251 = vadd.f32 %v250, %v237
    %252 = vst.msk [vmem:[#allocation10] sm:$0x1] %vm245, %v251
    %v253 = vld [vmem:[#allocation11] sm:$0x1]
    %v254 = vadd.f32 %v253, %v242
    %255 = vst.msk [vmem:[#allocation11] sm:$0x1] %vm245, %v254
    // Predicated region
    $region30: #{tpu_custom_call.1} parent=1 // pred_check
      _
    $region31: #{tpu_custom_call.1} parent=1 // pred_check_branch
      %257 = sbr.rel (0) target = $region33
    $region32: #{tpu_custom_call.1} parent=1 // pred_region
      %s259 = ssub.s32 16, 16
      %260 = vsyncadd [#allocation4], %s259
      %s262 = sshll.u32 [#allocation7], 4
      %s263 = int_to_ptr.vmem [resolvable:$true] %s262
      %265 = dma.vmem_to_hbm [thread:$0]  %s263, 16, %s4, [#allocation4]
    $region33: #{tpu_custom_call.1} parent=1 // pred_fallthru
      _
    // Predicated region
    $region34: #{tpu_custom_call.1} parent=1 // pred_check
      _
    $region35: #{tpu_custom_call.1} parent=1 // pred_check_branch
      %267 = sbr.rel (0) target = $region37
    $region36: #{tpu_custom_call.1} parent=1 // pred_region
      %s269 = ssub.s32 16, 16
      %270 = vsyncadd [#allocation9], %s269
      %s272 = sshll.u32 [#allocation8], 4
      %s273 = int_to_ptr.vmem [resolvable:$true] %s272
      %275 = dma.vmem_to_hbm [thread:$0]  %s273, 16, %s5, [#allocation9]
    $region37: #{tpu_custom_call.1} parent=1 // pred_fallthru
      _
    // Predicated region
    $region38: #{tpu_custom_call.1} parent=1 // pred_check
      _
    $region39: #{tpu_custom_call.1} parent=1 // pred_check_branch
      %277 = sbr.rel (0) target = $region41
    $region40: #{tpu_custom_call.1} parent=1 // pred_region
      %s279 = ssub.s32 16, 16
      %280 = vsyncadd [#allocation9], %s279
      %s282 = sshll.u32 [#allocation10], 4
      %s283 = int_to_ptr.vmem [resolvable:$true] %s282
      %285 = dma.vmem_to_hbm [thread:$0]  %s283, 16, %s6, [#allocation9]
    $region41: #{tpu_custom_call.1} parent=1 // pred_fallthru
      _
    // Predicated region
    $region42: #{tpu_custom_call.1} parent=1 // pred_check
      _
    $region43: #{tpu_custom_call.1} parent=1 // pred_check_branch
      %287 = sbr.rel (0) target = $region45
    $region44: #{tpu_custom_call.1} parent=1 // pred_region
      %s289 = ssub.s32 16, 16
      %290 = vsyncadd [#allocation12], %s289
      %s292 = sshll.u32 [#allocation11], 4
      %s293 = int_to_ptr.vmem [resolvable:$true] %s292
      %295 = dma.vmem_to_hbm [thread:$0]  %s293, 16, %s7, [#allocation12]
    $region45: #{tpu_custom_call.1} parent=1 // pred_fallthru
      _
    // Predicated region
    $region46: #{tpu_custom_call.1} parent=1 // pred_check
      _
    $region47: #{tpu_custom_call.1} parent=1 // pred_check_branch
      %297 = sbr.rel (0) target = $region49
    $region48: #{tpu_custom_call.1} parent=1 // pred_region
      %298 = dma.done [#allocation4], 16
    $region49: #{tpu_custom_call.1} parent=1 // pred_fallthru
      _
    // Predicated region
    $region50: #{tpu_custom_call.1} parent=1 // pred_check
      _
    $region51: #{tpu_custom_call.1} parent=1 // pred_check_branch
      %300 = sbr.rel (0) target = $region53
    $region52: #{tpu_custom_call.1} parent=1 // pred_region
      %301 = dma.done [#allocation9], 16
    $region53: #{tpu_custom_call.1} parent=1 // pred_fallthru
      _
    // Predicated region
    $region54: #{tpu_custom_call.1} parent=1 // pred_check
      _
    $region55: #{tpu_custom_call.1} parent=1 // pred_check_branch
      %303 = sbr.rel (0) target = $region57
    $region56: #{tpu_custom_call.1} parent=1 // pred_region
      %304 = dma.done [#allocation9], 16
    $region57: #{tpu_custom_call.1} parent=1 // pred_fallthru
      _
    // Predicated region
    $region58: #{tpu_custom_call.1} parent=1 // pred_check
      _
    $region59: #{tpu_custom_call.1} parent=1 // pred_check_branch
      %306 = sbr.rel (0) target = $region61
    $region60: #{tpu_custom_call.1} parent=1 // pred_region
      %307 = dma.done [#allocation12], 16
    $region61: #{tpu_custom_call.1} parent=1 // pred_fallthru
      _
    %308 = vsyncpa [#allocation3], 1
    %309 = vsyncpa [#allocation6], 1
    %310 = vsyncpa [#allocation4], 1
    %311 = vsyncpa [#allocation9], 1
    %312 = vsyncpa [#allocation12], 1

</llo_original>
